<compile_context>
chip_gen: v7x
topology: tpu7x:2x2x1
jax: 0.10.0
libtpu: 0.0.40
codegen_flags: <defaults>
</compile_context>

<pallas_src>
import functools

import jax
import jax.numpy as jnp
from jax import lax
from jax.experimental import pallas as pl
from jax.experimental.pallas import tpu as pltpu

BN_EPS = 1e-5
_LANE = 128
_MAX_TILE_B = 1024  # beyond this the f32 intermediates spill harder than the step-overhead win


def _round_up(n, m):
    return ((n + m - 1) // m) * m


def _pick_tile_b(batch):
    """Batch tile: large enough to amortize ~0.35us/grid-step pipeline overhead,
    small enough to keep >= 2 grid steps (megacore sharding on v7x) and to stay
    within the vreg/VMEM scratch budget for the f32 activation chain."""
    cap = min(_MAX_TILE_B, _round_up(batch, _LANE))
    half = _round_up(pl.cdiv(batch, 2), _LANE)
    return max(_LANE, min(cap, half))


def _mlp_kernel(x_ref, w1_ref, b1_ref, w2_ref, b2_ref, w3_ref, b3_ref,
                w4_ref, b4_ref, out_ref):
    # x arrives f32 straight from HBM; cast to bf16 in-kernel (VPU slot has slack).
    x = x_ref[...].astype(jnp.bfloat16)

    # Layer 1 (eval-mode BatchNorm folded into w1/b1) + ReLU.  Dropout = identity (eval).
    h = jnp.dot(x, w1_ref[...], preferred_element_type=jnp.float32) + b1_ref[...]
    h = jnp.maximum(h, 0.0)

    # Layer 2 + ReLU
    h = jnp.dot(h.astype(jnp.bfloat16), w2_ref[...],
                preferred_element_type=jnp.float32) + b2_ref[...]
    h = jnp.maximum(h, 0.0)

    # Layer 3 + ReLU
    h = jnp.dot(h.astype(jnp.bfloat16), w3_ref[...],
                preferred_element_type=jnp.float32) + b3_ref[...]
    h = jnp.maximum(h, 0.0)

    # Output layer (n_out == 1): (1, H) @ (TB, H)^T -> lane-dense (1, TB) row + Sigmoid.
    y = lax.dot_general(w4_ref[...], h.astype(jnp.bfloat16),
                        dimension_numbers=(((1,), (1,)), ((), ())),
                        preferred_element_type=jnp.float32)
    out_ref[...] = jax.nn.sigmoid(y + b4_ref[0])


def prepare_params(params):
    """Fold eval-mode BatchNorm into the first Linear; cast weights to bf16."""
    gamma, beta, mean, var, w1, b1, w2, b2, w3, b3, w4, b4 = params
    scale = gamma * lax.rsqrt(var + BN_EPS)                 # (F,)
    shift = beta - mean * scale                             # (F,)
    w1f = (w1 * scale[:, None]).astype(jnp.bfloat16)        # (F, H)
    b1f = (b1 + shift[None, :] @ w1).astype(jnp.float32)    # (1, H)
    w4r = w4.T.astype(jnp.bfloat16)                         # (1, H) row (n_out == 1)
    b4s = b4.reshape(-1).astype(jnp.float32)                # (1,) scalar, goes to SMEM
    return (w1f, b1f,
            w2.astype(jnp.bfloat16), b2.astype(jnp.float32),
            w3.astype(jnp.bfloat16), b3.astype(jnp.float32),
            w4r, b4s)


@functools.partial(jax.jit, static_argnames=("tile_b",))
def mlp_reg_baseline_forward(x, prepared, tile_b=None):
    """x: (B, A, L) float32.  Returns (B,) float32 (n_output_nodes == 1)."""
    w1f, b1f, w2b, b2, w3b, b3, w4r, b4 = prepared
    B = x.shape[0]
    F = x.shape[1] * x.shape[2]
    H = w1f.shape[1]
    assert w4r.shape[0] == 1  # TODO(synk): n_output_nodes > 1 path not implemented

    if tile_b is None:
        tile_b = _pick_tile_b(B)
    n_tiles = pl.cdiv(B, tile_b)

    # No host-side pad or cast: x stays f32 in HBM, the kernel is the only pass over it.
    x2d = x.reshape(B, F)

    weight_bytes = ((w1f.size + w2b.size + w3b.size + w4r.size) * 2
                    + (b1f.size + b2.size + b3.size + b4.size) * 4)
    cost = pl.CostEstimate(
        flops=2 * B * (F * H + 2 * H * H + H),
        transcendentals=B,
        bytes_accessed=x2d.size * 4 + weight_bytes + B * 4,
    )

    # Scoped-VMEM budget: double-buffered f32 x tiles + single-buffered bf16 weights
    # + f32 activation scratch + output rows, with >= 2x headroom; capped v7x-safe.
    vmem_needed = (2 * tile_b * F * 4 + weight_bytes
                   + 4 * tile_b * H * 4 + 2 * 8 * tile_b * 4)
    vmem_limit = int(min(max(2 * vmem_needed + (4 << 20), 32 << 20), 64 << 20))

    resident = dict(pipeline_mode=pl.Buffered(1))  # constant-index operands: 1 buffer

    out = pl.pallas_call(
        _mlp_kernel,
        out_shape=jax.ShapeDtypeStruct((1, B), jnp.float32),
        grid=(n_tiles,),
        in_specs=[
            pl.BlockSpec((tile_b, F), lambda i: (i, 0)),          # x tile (f32), pipelined
            pl.BlockSpec((F, H), lambda i: (0, 0), **resident),   # w1 (BN folded), resident
            pl.BlockSpec((1, H), lambda i: (0, 0), **resident),   # b1
            pl.BlockSpec((H, H), lambda i: (0, 0), **resident),   # w2
            pl.BlockSpec((1, H), lambda i: (0, 0), **resident),   # b2
            pl.BlockSpec((H, H), lambda i: (0, 0), **resident),   # w3
            pl.BlockSpec((1, H), lambda i: (0, 0), **resident),   # b3
            pl.BlockSpec((1, H), lambda i: (0, 0), **resident),   # w4 row
            pl.BlockSpec(memory_space=pltpu.MemorySpace.SMEM),    # b4 scalar (no VMEM tile)
        ],
        out_specs=pl.BlockSpec((1, tile_b), lambda i: (0, i)),    # lane-dense output row
        compiler_params=pltpu.CompilerParams(
            dimension_semantics=("parallel",),
            vmem_limit_bytes=vmem_limit),
        cost_estimate=cost,
    )(x2d, w1f, b1f, w2b, b2, w3b, b3, w4r, b4)

    # n_output_nodes == 1 -> sigmoid applied in-kernel; squeeze happens here.
    return out[0]


def init_params(key, flatten_shape, hidden, n_out):
    ks = jax.random.split(key, 6)

    def lin(k, fan_in, fan_out):
        bound = 1.0 / jnp.sqrt(jnp.float32(fan_in))
        kw, kb = jax.random.split(k)
        w = jax.random.uniform(kw, (fan_in, fan_out), jnp.float32, -bound, bound)
        b = jax.random.uniform(kb, (1, fan_out), jnp.float32, -bound, bound)
        return w, b

    gamma = jnp.ones((flatten_shape,), jnp.float32)
    beta = jnp.zeros((flatten_shape,), jnp.float32)
    mean = jax.random.normal(ks[0], (flatten_shape,), jnp.float32) * 0.1
    var = jnp.abs(jax.random.normal(ks[1], (flatten_shape,), jnp.float32)) * 0.1 + 1.0

    w1, b1 = lin(ks[2], flatten_shape, hidden)
    w2, b2 = lin(ks[3], hidden, hidden)
    w3, b3 = lin(ks[4], hidden, hidden)
    w4, b4 = lin(ks[5], hidden, n_out)
    return (gamma, beta, mean, var, w1, b1, w2, b2, w3, b3, w4, b4)


def _ref_forward_bf16(x2d, prepared):
    """Pure-JAX version of the exact kernel math (bf16 matmuls, f32 accumulation)."""
    w1f, b1f, w2b, b2, w3b, b3, w4r, b4 = prepared
    h = jnp.dot(x2d.astype(jnp.bfloat16), w1f, preferred_element_type=jnp.float32) + b1f
    h = jnp.maximum(h, 0.0)
    h = jnp.dot(h.astype(jnp.bfloat16), w2b, preferred_element_type=jnp.float32) + b2
    h = jnp.maximum(h, 0.0)
    h = jnp.dot(h.astype(jnp.bfloat16), w3b, preferred_element_type=jnp.float32) + b3
    h = jnp.maximum(h, 0.0)
    y = jnp.dot(h.astype(jnp.bfloat16), w4r.T, preferred_element_type=jnp.float32) + b4
    return jax.nn.sigmoid(y)[:, 0]


def _ref_forward_f32(x, params):
    """Original module semantics (f32, unfolded BatchNorm), eval mode."""
    gamma, beta, mean, var, w1, b1, w2, b2, w3, b3, w4, b4 = params
    B = x.shape[0]
    h = x.reshape(B, -1)
    h = (h - mean) * lax.rsqrt(var + BN_EPS) * gamma + beta
    h = jnp.maximum(h @ w1 + b1, 0.0)
    h = jnp.maximum(h @ w2 + b2, 0.0)
    h = jnp.maximum(h @ w3 + b3, 0.0)
    return jax.nn.sigmoid(h @ w4 + b4)[:, 0]


if __name__ == "__main__":
    # Small shapes consistent with the module: input_shape=(8, 16) -> flatten 128,
    # neurons_per_layer=128, n_output_nodes=1.  Batch 200 exercises the 2-step grid
    # (tile_b=128) including the ragged last tile with no host-side padding.
    B, A, L = 200, 8, 16
    F = A * L
    H = 128
    N_OUT = 1

    key = jax.random.PRNGKey(0)
    kx, kp = jax.random.split(key)
    x = jax.random.normal(kx, (B, A, L), jnp.float32)
    params = init_params(kp, F, H, N_OUT)
    prepared = prepare_params(params)

    y = mlp_reg_baseline_forward(x, prepared)
    y = jax.block_until_ready(y)
    assert y.shape == (B,), y.shape
    assert bool(jnp.all(jnp.isfinite(y)))

    # Tight check against a pure-JAX version of the exact kernel math.
    ref_bf16 = _ref_forward_bf16(x.reshape(B, F), prepared)
    assert jnp.allclose(y, ref_bf16, atol=1e-4, rtol=1e-4), \
        float(jnp.max(jnp.abs(y - ref_bf16)))

    # Loose sanity check against the original f32, unfolded-BN module semantics
    # (differences only from the bf16 weight/activation cast).
    ref_f32 = _ref_forward_f32(x, params)
    assert jnp.allclose(y, ref_f32, atol=5e-2), \
        float(jnp.max(jnp.abs(y - ref_f32)))

    print("KERNEL_OK")
</pallas_src>

<mosaic_0001>
module attributes {stable_mosaic.version = 11 : i64} {
  func.func @_mlp_kernel(%arg0: i32, %arg1: memref<128x128xf32, #tpu.memory_space<vmem>>, %arg2: memref<128x128xbf16, #tpu.memory_space<vmem>>, %arg3: memref<1x128xf32, #tpu.memory_space<vmem>>, %arg4: memref<128x128xbf16, #tpu.memory_space<vmem>>, %arg5: memref<1x128xf32, #tpu.memory_space<vmem>>, %arg6: memref<128x128xbf16, #tpu.memory_space<vmem>>, %arg7: memref<1x128xf32, #tpu.memory_space<vmem>>, %arg8: memref<1x128xbf16, #tpu.memory_space<vmem>>, %arg9: memref<1xf32, #tpu.memory_space<smem>>, %arg10: memref<1x128xf32, #tpu.memory_space<vmem>>) attributes {dimension_semantics = [#tpu.dimension_semantics<parallel>], iteration_bounds = array<i64: 2>, scalar_prefetch = 0 : i64, scratch_operands = 0 : i64, tpu.core_type = #tpu.core_type<tc>, window_params = [{transform_indices = @transform_0, window_bounds = array<i64: 128, 128>}, {pipeline_mode = #tpu.pipeline_mode<synchronous>, transform_indices = @transform_1, window_bounds = array<i64: 128, 128>}, {pipeline_mode = #tpu.pipeline_mode<synchronous>, transform_indices = @transform_2, window_bounds = array<i64: 1, 128>}, {pipeline_mode = #tpu.pipeline_mode<synchronous>, transform_indices = @transform_3, window_bounds = array<i64: 128, 128>}, {pipeline_mode = #tpu.pipeline_mode<synchronous>, transform_indices = @transform_4, window_bounds = array<i64: 1, 128>}, {pipeline_mode = #tpu.pipeline_mode<synchronous>, transform_indices = @transform_5, window_bounds = array<i64: 128, 128>}, {pipeline_mode = #tpu.pipeline_mode<synchronous>, transform_indices = @transform_6, window_bounds = array<i64: 1, 128>}, {pipeline_mode = #tpu.pipeline_mode<synchronous>, transform_indices = @transform_7, window_bounds = array<i64: 1, 128>}, {transform_indices = @transform_8, window_bounds = array<i64: 1>}, {transform_indices = @transform_9, window_bounds = array<i64: 1, 128>}]} {
    %c0 = arith.constant 0 : index
    %c0_0 = arith.constant 0 : index
    %0 = vector.load %arg1[%c0, %c0_0] : memref<128x128xf32, #tpu.memory_space<vmem>>, vector<128x128xf32>
    %1 = arith.truncf %0 : vector<128x128xf32> to vector<128x128xbf16>
    %c0_1 = arith.constant 0 : index
    %c0_2 = arith.constant 0 : index
    %2 = vector.load %arg2[%c0_1, %c0_2] : memref<128x128xbf16, #tpu.memory_space<vmem>>, vector<128x128xbf16>
    %cst = arith.constant dense<0.000000e+00> : vector<128x128xf32>
    %3 = tpu.matmul %1, %2, %cst {dimension_numbers = #tpu.dot_dimension_numbers<[1], [0], [0], [1], [0, 0, 1, 1], [], []>} : vector<128x128xbf16>, vector<128x128xbf16>, vector<128x128xf32> -> vector<128x128xf32>
    %c0_3 = arith.constant 0 : index
    %c0_4 = arith.constant 0 : index
    %4 = vector.load %arg3[%c0_3, %c0_4] : memref<1x128xf32, #tpu.memory_space<vmem>>, vector<1x128xf32>
    %5 = vector.broadcast %4 : vector<1x128xf32> to vector<128x128xf32>
    %6 = arith.addf %3, %5 : vector<128x128xf32>
    %cst_5 = arith.constant 0.000000e+00 : f32
    %7 = vector.broadcast %cst_5 : f32 to vector<128x128xf32>
    %8 = arith.maximumf %6, %7 : vector<128x128xf32>
    %9 = arith.truncf %8 : vector<128x128xf32> to vector<128x128xbf16>
    %c0_6 = arith.constant 0 : index
    %c0_7 = arith.constant 0 : index
    %10 = vector.load %arg4[%c0_6, %c0_7] : memref<128x128xbf16, #tpu.memory_space<vmem>>, vector<128x128xbf16>
    %cst_8 = arith.constant dense<0.000000e+00> : vector<128x128xf32>
    %11 = tpu.matmul %9, %10, %cst_8 {dimension_numbers = #tpu.dot_dimension_numbers<[1], [0], [0], [1], [0, 0, 1, 1], [], []>} : vector<128x128xbf16>, vector<128x128xbf16>, vector<128x128xf32> -> vector<128x128xf32>
    %c0_9 = arith.constant 0 : index
    %c0_10 = arith.constant 0 : index
    %12 = vector.load %arg5[%c0_9, %c0_10] : memref<1x128xf32, #tpu.memory_space<vmem>>, vector<1x128xf32>
    %13 = vector.broadcast %12 : vector<1x128xf32> to vector<128x128xf32>
    %14 = arith.addf %11, %13 : vector<128x128xf32>
    %cst_11 = arith.constant 0.000000e+00 : f32
    %15 = vector.broadcast %cst_11 : f32 to vector<128x128xf32>
    %16 = arith.maximumf %14, %15 : vector<128x128xf32>
    %17 = arith.truncf %16 : vector<128x128xf32> to vector<128x128xbf16>
    %c0_12 = arith.constant 0 : index
    %c0_13 = arith.constant 0 : index
    %18 = vector.load %arg6[%c0_12, %c0_13] : memref<128x128xbf16, #tpu.memory_space<vmem>>, vector<128x128xbf16>
    %cst_14 = arith.constant dense<0.000000e+00> : vector<128x128xf32>
    %19 = tpu.matmul %17, %18, %cst_14 {dimension_numbers = #tpu.dot_dimension_numbers<[1], [0], [0], [1], [0, 0, 1, 1], [], []>} : vector<128x128xbf16>, vector<128x128xbf16>, vector<128x128xf32> -> vector<128x128xf32>
    %c0_15 = arith.constant 0 : index
    %c0_16 = arith.constant 0 : index
    %20 = vector.load %arg7[%c0_15, %c0_16] : memref<1x128xf32, #tpu.memory_space<vmem>>, vector<1x128xf32>
    %21 = vector.broadcast %20 : vector<1x128xf32> to vector<128x128xf32>
    %22 = arith.addf %19, %21 : vector<128x128xf32>
    %cst_17 = arith.constant 0.000000e+00 : f32
    %23 = vector.broadcast %cst_17 : f32 to vector<128x128xf32>
    %24 = arith.maximumf %22, %23 : vector<128x128xf32>
    %c0_18 = arith.constant 0 : index
    %c0_19 = arith.constant 0 : index
    %25 = vector.load %arg8[%c0_18, %c0_19] : memref<1x128xbf16, #tpu.memory_space<vmem>>, vector<1x128xbf16>
    %26 = arith.truncf %24 : vector<128x128xf32> to vector<128x128xbf16>
    %cst_20 = arith.constant dense<0.000000e+00> : vector<1x128xf32>
    %27 = tpu.matmul %25, %26, %cst_20 {dimension_numbers = #tpu.dot_dimension_numbers<[1], [1], [0], [0], [0, 0, 1, 0], [], []>} : vector<1x128xbf16>, vector<128x128xbf16>, vector<1x128xf32> -> vector<1x128xf32>
    %c0_21 = arith.constant 0 : index
    %28 = memref.load %arg9[%c0_21] : memref<1xf32, #tpu.memory_space<smem>>
    %29 = vector.broadcast %28 : f32 to vector<1x128xf32>
    %30 = arith.addf %27, %29 : vector<1x128xf32>
    %31 = arith.negf %30 : vector<1x128xf32>
    %32 = math.exp %31 : vector<1x128xf32>
    %cst_22 = arith.constant 1.000000e+00 : f32
    %33 = vector.broadcast %cst_22 : f32 to vector<1x128xf32>
    %34 = arith.addf %33, %32 : vector<1x128xf32>
    %35 = arith.divf %33, %34 : vector<1x128xf32>
    %c0_23 = arith.constant 0 : index
    %c0_24 = arith.constant 0 : index
    %36 = vector.load %arg10[%c0_23, %c0_24] : memref<1x128xf32, #tpu.memory_space<vmem>>, vector<1x128xf32>
    tpu.vector_store %arg10[%c0_23, %c0_24], %35 {strides = array<i32>} : memref<1x128xf32, #tpu.memory_space<vmem>>, vector<1x128xf32>,
    return
  }
  func.func @transform_0(%arg0: i32) -> (i32, i32) {
    %c0_i32 = arith.constant 0 : i32
    %c0_i32_0 = arith.constant 0 : i32
    return %arg0, %c0_i32 : i32, i32
  }
  func.func @transform_1(%arg0: i32) -> (i32, i32) {
    %c0_i32 = arith.constant 0 : i32
    %c0_i32_0 = arith.constant 0 : i32
    %c0_i32_1 = arith.constant 0 : i32
    return %c0_i32, %c0_i32_0 : i32, i32
  }
  func.func @transform_2(%arg0: i32) -> (i32, i32) {
    %c0_i32 = arith.constant 0 : i32
    %c0_i32_0 = arith.constant 0 : i32
    %c0_i32_1 = arith.constant 0 : i32
    return %c0_i32, %c0_i32_0 : i32, i32
  }
  func.func @transform_3(%arg0: i32) -> (i32, i32) {
    %c0_i32 = arith.constant 0 : i32
    %c0_i32_0 = arith.constant 0 : i32
    %c0_i32_1 = arith.constant 0 : i32
    return %c0_i32, %c0_i32_0 : i32, i32
  }
  func.func @transform_4(%arg0: i32) -> (i32, i32) {
    %c0_i32 = arith.constant 0 : i32
    %c0_i32_0 = arith.constant 0 : i32
    %c0_i32_1 = arith.constant 0 : i32
    return %c0_i32, %c0_i32_0 : i32, i32
  }
  func.func @transform_5(%arg0: i32) -> (i32, i32) {
    %c0_i32 = arith.constant 0 : i32
    %c0_i32_0 = arith.constant 0 : i32
    %c0_i32_1 = arith.constant 0 : i32
    return %c0_i32, %c0_i32_0 : i32, i32
  }
  func.func @transform_6(%arg0: i32) -> (i32, i32) {
    %c0_i32 = arith.constant 0 : i32
    %c0_i32_0 = arith.constant 0 : i32
    %c0_i32_1 = arith.constant 0 : i32
    return %c0_i32, %c0_i32_0 : i32, i32
  }
  func.func @transform_7(%arg0: i32) -> (i32, i32) {
    %c0_i32 = arith.constant 0 : i32
    %c0_i32_0 = arith.constant 0 : i32
    %c0_i32_1 = arith.constant 0 : i32
    return %c0_i32, %c0_i32_0 : i32, i32
  }
  func.func @transform_8(%arg0: i32) -> i32 {
    %c0_i32 = arith.constant 0 : i32
    %c0_i32_0 = arith.constant 0 : i32
    return %c0_i32 : i32
  }
  func.func @transform_9(%arg0: i32) -> (i32, i32) {
    %c0_i32 = arith.constant 0 : i32
    %c0_i32_0 = arith.constant 0 : i32
    return %c0_i32, %arg0 : i32, i32
  }
}

</mosaic_0001>

<llo_original>
// kernel: mlp_reg_baseline_forward.1
$region0: #{mlp_reg_baseline_forward.1}
  #allocation0 [shape = 'u32[]', space=smem, size = 0x4, offset = 0x4, fixed_abs, tag = 'smem constant byte address 0x4 - core index']
  #allocation1 [shape = 'u32[144,128]{1,0:T(1,128)}', space=vmem, size = 0x12000, scoped, tag = 'internal scratch']
  #allocation2 [shape = 'f32[1]{0:T(128)S(6)}', space=smem, size = 0x200, scoped, tag = 'scoped memory for mlp_reg_baseline_forward.1']
  %s0 = inlined_call_operand.vmem [shape: f32[200,128], index: 0, kind: input, shape index: {}]
  %s1 = inlined_call_operand.vmem [shape: bf16[128,128], index: 1, kind: input, shape index: {}]
  %s2 = inlined_call_operand.vmem [shape: f32[1,128], index: 2, kind: input, shape index: {}]
  %s3 = inlined_call_operand.vmem [shape: bf16[128,128], index: 3, kind: input, shape index: {}]
  %s4 = inlined_call_operand.vmem [shape: f32[1,128], index: 4, kind: input, shape index: {}]
  %s5 = inlined_call_operand.vmem [shape: bf16[128,128], index: 5, kind: input, shape index: {}]
  %s6 = inlined_call_operand.vmem [shape: f32[1,128], index: 6, kind: input, shape index: {}]
  %s7 = inlined_call_operand.vmem [shape: bf16[1,128], index: 7, kind: input, shape index: {}]
  %s8 = inlined_call_operand.<no memory space> [shape: f32[1], index: 8, kind: input, shape index: {}]
  %s9 = inlined_call_operand.hbm [shape: f32[1,200], index: 9, kind: output, shape index: {}]
  %s10 = sld [smem:[#allocation0]]
  $region69: #{mlp_reg_baseline_forward.1} parent=0
    _
  %s12 = ssub.s32 1, %s10
  %s13 = scalar_select 0, %s12, %s10
  %14 = sst [smem:[#allocation2]] %s8
  $region1: #{mlp_reg_baseline_forward.1} parent=0
    #allocation3 [shape = 'u8[1024]{0}', space=vmem, size = 0x400, scoped, tag = 'output window, operand 0']
    #allocation4 [shape = 's32[2]{0}', space=sflag, size = 0x8, scoped, tag = 'scoped memory for mlp_reg_baseline_forward.1']
    %15 = vsyncpa [#allocation4], 0
    %s16 = scalar_lea.sflag [#allocation4], 1
    %17 = vsyncpa %s16, 0
    loop: start=0, step=1, limit=4
    $region2: #{mlp_reg_baseline_forward.1} parent=1 // loop_pre_header
      _
    $region3: #{mlp_reg_baseline_forward.1} parent=1 // loop_header
      %s19 = sphi 0, %s23
      %p20 = scmp.ge.s32.totalorder %s19, 4
      %s29 = sphi 0, %s31
      %s32 = sphi 0, %s29
      %s33 = sphi 0, %s32
      %s49 = sphi 0, %s33
      %s53 = sphi 0, %s53
      %s55 = sphi 0, %s53
      %s56 = sphi 0, %s55
      %s70 = sphi 0, %s56
      %s74 = sphi 0, %s74
      %s76 = sphi 0, %s74
      %s77 = sphi 0, %s76
      %s91 = sphi 0, %s77
      %s95 = sphi 0, %s95
      %s97 = sphi 0, %s95
      %s98 = sphi 0, %s97
      %s112 = sphi 0, %s98
      %s116 = sphi 0, %s116
      %s118 = sphi 0, %s116
      %s119 = sphi 0, %s118
      %s133 = sphi 0, %s119
      %s137 = sphi 0, %s137
      %s139 = sphi 0, %s137
      %s140 = sphi 0, %s139
      %s154 = sphi 0, %s140
      %s158 = sphi 0, %s158
      %s160 = sphi 0, %s158
      %s161 = sphi 0, %s160
      %s175 = sphi 0, %s161
      %s179 = sphi 0, %s179
      %s181 = sphi 0, %s179
      %s182 = sphi 0, %s181
      %s196 = sphi 0, %s182
      %s200 = sphi 0, %s200
      %s202 = sphi 0, %s200
      %s203 = sphi 0, %s202
      %s217 = sphi 0, %s203
      %s223 = sphi 0, %s225
      %s226 = sphi 0, %s223
      %s227 = sphi 0, %s226
      %s243 = sphi 0, %s227
    $region4: #{mlp_reg_baseline_forward.1} parent=1 // loop_header_branch
      %22 = sbr.rel (%p20) target = $region8
    $region5: #{mlp_reg_baseline_forward.1} parent=1 // loop_body
      %s24 = ssub.s32 %s19, 1
      %s25 = ssub.s32 %s19, 2
      %s26 = sadd.s32 %s19, 1
      %s27 = ssub.s32 %s19, %s26
      %p28 = scmp.eq.s32.totalorder %s27, 0
      %s30 = sadd.s32 %s29, 1
      %s31 = scalar_select %p28, %s29, %s30
      %p34 = pneg %p28
      %p35 = scmp.eq.s32.totalorder %s19, 1
      %p36 = por %p34, %p35
      %p37 = scmp.ne.s32.totalorder %s29, %s32
      %p38 = scmp.eq.s32.totalorder %s19, 0
      %p39 = por %p37, %p38
      %p40 = scmp.ne.s32.totalorder %s29, %s32
      %p41 = scmp.eq.s32.totalorder %s24, 1
      %p42 = por %p40, %p41
      %p43 = scmp.ne.s32.totalorder %s32, %s33
      %p44 = scmp.eq.s32.totalorder %s24, 0
      %p45 = por %p43, %p44
      %p46 = scmp.ne.s32.totalorder %s32, %s33
      %p47 = scmp.eq.s32.totalorder %s25, 1
      %p48 = por %p46, %p47
      %p50 = scmp.ne.s32.totalorder %s33, %s49
      %p51 = scmp.eq.s32.totalorder %s25, 0
      %p52 = por %p50, %p51
      %s54 = sadd.s32 %s53, 1
      %p57 = scmp.eq.s32.totalorder %s19, 1
      %p58 = scmp.ne.s32.totalorder %s53, %s55
      %p59 = scmp.eq.s32.totalorder %s19, 0
      %p60 = por %p58, %p59
      %p61 = scmp.ne.s32.totalorder %s53, %s55
      %p62 = scmp.eq.s32.totalorder %s24, 1
      %p63 = por %p61, %p62
      %p64 = scmp.ne.s32.totalorder %s55, %s56
      %p65 = scmp.eq.s32.totalorder %s24, 0
      %p66 = por %p64, %p65
      %p67 = scmp.ne.s32.totalorder %s55, %s56
      %p68 = scmp.eq.s32.totalorder %s25, 1
      %p69 = por %p67, %p68
      %p71 = scmp.ne.s32.totalorder %s56, %s70
      %p72 = scmp.eq.s32.totalorder %s25, 0
      %p73 = por %p71, %p72
      %s75 = sadd.s32 %s74, 1
      %p78 = scmp.eq.s32.totalorder %s19, 1
      %p79 = scmp.ne.s32.totalorder %s74, %s76
      %p80 = scmp.eq.s32.totalorder %s19, 0
      %p81 = por %p79, %p80
      %p82 = scmp.ne.s32.totalorder %s74, %s76
      %p83 = scmp.eq.s32.totalorder %s24, 1
      %p84 = por %p82, %p83
      %p85 = scmp.ne.s32.totalorder %s76, %s77
      %p86 = scmp.eq.s32.totalorder %s24, 0
      %p87 = por %p85, %p86
      %p88 = scmp.ne.s32.totalorder %s76, %s77
      %p89 = scmp.eq.s32.totalorder %s25, 1
      %p90 = por %p88, %p89
      %p92 = scmp.ne.s32.totalorder %s77, %s91
      %p93 = scmp.eq.s32.totalorder %s25, 0
      %p94 = por %p92, %p93
      %s96 = sadd.s32 %s95, 1
      %p99 = scmp.eq.s32.totalorder %s19, 1
      %p100 = scmp.ne.s32.totalorder %s95, %s97
      %p101 = scmp.eq.s32.totalorder %s19, 0
      %p102 = por %p100, %p101
      %p103 = scmp.ne.s32.totalorder %s95, %s97
      %p104 = scmp.eq.s32.totalorder %s24, 1
      %p105 = por %p103, %p104
      %p106 = scmp.ne.s32.totalorder %s97, %s98
      %p107 = scmp.eq.s32.totalorder %s24, 0
      %p108 = por %p106, %p107
      %p109 = scmp.ne.s32.totalorder %s97, %s98
      %p110 = scmp.eq.s32.totalorder %s25, 1
      %p111 = por %p109, %p110
      %p113 = scmp.ne.s32.totalorder %s98, %s112
      %p114 = scmp.eq.s32.totalorder %s25, 0
      %p115 = por %p113, %p114
      %s117 = sadd.s32 %s116, 1
      %p120 = scmp.eq.s32.totalorder %s19, 1
      %p121 = scmp.ne.s32.totalorder %s116, %s118
      %p122 = scmp.eq.s32.totalorder %s19, 0
      %p123 = por %p121, %p122
      %p124 = scmp.ne.s32.totalorder %s116, %s118
      %p125 = scmp.eq.s32.totalorder %s24, 1
      %p126 = por %p124, %p125
      %p127 = scmp.ne.s32.totalorder %s118, %s119
      %p128 = scmp.eq.s32.totalorder %s24, 0
      %p129 = por %p127, %p128
      %p130 = scmp.ne.s32.totalorder %s118, %s119
      %p131 = scmp.eq.s32.totalorder %s25, 1
      %p132 = por %p130, %p131
      %p134 = scmp.ne.s32.totalorder %s119, %s133
      %p135 = scmp.eq.s32.totalorder %s25, 0
      %p136 = por %p134, %p135
      %s138 = sadd.s32 %s137, 1
      %p141 = scmp.eq.s32.totalorder %s19, 1
      %p142 = scmp.ne.s32.totalorder %s137, %s139
      %p143 = scmp.eq.s32.totalorder %s19, 0
      %p144 = por %p142, %p143
      %p145 = scmp.ne.s32.totalorder %s137, %s139
      %p146 = scmp.eq.s32.totalorder %s24, 1
      %p147 = por %p145, %p146
      %p148 = scmp.ne.s32.totalorder %s139, %s140
      %p149 = scmp.eq.s32.totalorder %s24, 0
      %p150 = por %p148, %p149
      %p151 = scmp.ne.s32.totalorder %s139, %s140
      %p152 = scmp.eq.s32.totalorder %s25, 1
      %p153 = por %p151, %p152
      %p155 = scmp.ne.s32.totalorder %s140, %s154
      %p156 = scmp.eq.s32.totalorder %s25, 0
      %p157 = por %p155, %p156
      %s159 = sadd.s32 %s158, 1
      %p162 = scmp.eq.s32.totalorder %s19, 1
      %p163 = scmp.ne.s32.totalorder %s158, %s160
      %p164 = scmp.eq.s32.totalorder %s19, 0
      %p165 = por %p163, %p164
      %p166 = scmp.ne.s32.totalorder %s158, %s160
      %p167 = scmp.eq.s32.totalorder %s24, 1
      %p168 = por %p166, %p167
      %p169 = scmp.ne.s32.totalorder %s160, %s161
      %p170 = scmp.eq.s32.totalorder %s24, 0
      %p171 = por %p169, %p170
      %p172 = scmp.ne.s32.totalorder %s160, %s161
      %p173 = scmp.eq.s32.totalorder %s25, 1
      %p174 = por %p172, %p173
      %p176 = scmp.ne.s32.totalorder %s161, %s175
      %p177 = scmp.eq.s32.totalorder %s25, 0
      %p178 = por %p176, %p177
      %s180 = sadd.s32 %s179, 1
      %p183 = scmp.eq.s32.totalorder %s19, 1
      %p184 = scmp.ne.s32.totalorder %s179, %s181
      %p185 = scmp.eq.s32.totalorder %s19, 0
      %p186 = por %p184, %p185
      %p187 = scmp.ne.s32.totalorder %s179, %s181
      %p188 = scmp.eq.s32.totalorder %s24, 1
      %p189 = por %p187, %p188
      %p190 = scmp.ne.s32.totalorder %s181, %s182
      %p191 = scmp.eq.s32.totalorder %s24, 0
      %p192 = por %p190, %p191
      %p193 = scmp.ne.s32.totalorder %s181, %s182
      %p194 = scmp.eq.s32.totalorder %s25, 1
      %p195 = por %p193, %p194
      %p197 = scmp.ne.s32.totalorder %s182, %s196
      %p198 = scmp.eq.s32.totalorder %s25, 0
      %p199 = por %p197, %p198
      %s201 = sadd.s32 %s200, 1
      %p204 = scmp.eq.s32.totalorder %s19, 1
      %p205 = scmp.ne.s32.totalorder %s200, %s202
      %p206 = scmp.eq.s32.totalorder %s19, 0
      %p207 = por %p205, %p206
      %p208 = scmp.ne.s32.totalorder %s200, %s202
      %p209 = scmp.eq.s32.totalorder %s24, 1
      %p210 = por %p208, %p209
      %p211 = scmp.ne.s32.totalorder %s202, %s203
      %p212 = scmp.eq.s32.totalorder %s24, 0
      %p213 = por %p211, %p212
      %p214 = scmp.ne.s32.totalorder %s202, %s203
      %p215 = scmp.eq.s32.totalorder %s25, 1
      %p216 = por %p214, %p215
      %p218 = scmp.ne.s32.totalorder %s203, %s217
      %p219 = scmp.eq.s32.totalorder %s25, 0
      %p220 = por %p218, %p219
      %s221 = ssub.s32 %s19, %s26
      %p222 = scmp.eq.s32.totalorder %s221, 0
      %s224 = sadd.s32 %s223, 1
      %s225 = scalar_select %p222, %s223, %s224
      %p228 = pneg %p222
      %p229 = scmp.eq.s32.totalorder %s19, 1
      %p230 = por %p228, %p229
      %p231 = scmp.ne.s32.totalorder %s223, %s226
      %p232 = scmp.eq.s32.totalorder %s19, 0
      %p233 = por %p231, %p232
      %p234 = scmp.ne.s32.totalorder %s223, %s226
      %p235 = scmp.eq.s32.totalorder %s24, 1
      %p236 = por %p234, %p235
      %p237 = scmp.ne.s32.totalorder %s226, %s227
      %p238 = scmp.eq.s32.totalorder %s24, 0
      %p239 = por %p237, %p238
      %p240 = scmp.ne.s32.totalorder %s226, %s227
      %p241 = scmp.eq.s32.totalorder %s25, 1
      %p242 = por %p240, %p241
      %p244 = scmp.ne.s32.totalorder %s227, %s243
      %p245 = scmp.eq.s32.totalorder %s25, 0
      %p246 = por %p244, %p245
      %p247 = scmp.le.s32.totalorder 1, %s19
      %p248 = scmp.lt.s32.totalorder %s19, 3
      %p249 = pnand %p247, %p248
      %p250 = pneg %p249
      // Predicated region
      $region9: #{mlp_reg_baseline_forward.1} parent=5 // pred_check
        _
      $region10: #{mlp_reg_baseline_forward.1} parent=5 // pred_check_branch
        %252 = sbr.rel (%p249) target = $region12
      $region11: #{mlp_reg_baseline_forward.1} parent=5 // pred_region
        %s253 = ssub.s32 %s19, 1
        // Predicated region
        $region13: #{mlp_reg_baseline_forward.1} parent=11 // pred_check
          %p254 = pneg %p66
        $region14: #{mlp_reg_baseline_forward.1} parent=11 // pred_check_branch
          %256 = sbr.rel (%p254) target = $region16
        $region15: #{mlp_reg_baseline_forward.1} parent=11 // pred_region
          _
        $region16: #{mlp_reg_baseline_forward.1} parent=11 // pred_fallthru
          _
        // Predicated region
        $region17: #{mlp_reg_baseline_forward.1} parent=11 // pred_check
          %p257 = pneg %p87
        $region18: #{mlp_reg_baseline_forward.1} parent=11 // pred_check_branch
          %259 = sbr.rel (%p257) target = $region20
        $region19: #{mlp_reg_baseline_forward.1} parent=11 // pred_region
          _
        $region20: #{mlp_reg_baseline_forward.1} parent=11 // pred_fallthru
          _
        // Predicated region
        $region21: #{mlp_reg_baseline_forward.1} parent=11 // pred_check
          %p260 = pneg %p108
        $region22: #{mlp_reg_baseline_forward.1} parent=11 // pred_check_branch
          %262 = sbr.rel (%p260) target = $region24
        $region23: #{mlp_reg_baseline_forward.1} parent=11 // pred_region
          _
        $region24: #{mlp_reg_baseline_forward.1} parent=11 // pred_fallthru
          _
        // Predicated region
        $region25: #{mlp_reg_baseline_forward.1} parent=11 // pred_check
          %p263 = pneg %p129
        $region26: #{mlp_reg_baseline_forward.1} parent=11 // pred_check_branch
          %265 = sbr.rel (%p263) target = $region28
        $region27: #{mlp_reg_baseline_forward.1} parent=11 // pred_region
          _
        $region28: #{mlp_reg_baseline_forward.1} parent=11 // pred_fallthru
          _
        // Predicated region
        $region29: #{mlp_reg_baseline_forward.1} parent=11 // pred_check
          %p266 = pneg %p150
        $region30: #{mlp_reg_baseline_forward.1} parent=11 // pred_check_branch
          %268 = sbr.rel (%p266) target = $region32
        $region31: #{mlp_reg_baseline_forward.1} parent=11 // pred_region
          _
        $region32: #{mlp_reg_baseline_forward.1} parent=11 // pred_fallthru
          _
        // Predicated region
        $region33: #{mlp_reg_baseline_forward.1} parent=11 // pred_check
          %p269 = pneg %p171
        $region34: #{mlp_reg_baseline_forward.1} parent=11 // pred_check_branch
          %271 = sbr.rel (%p269) target = $region36
        $region35: #{mlp_reg_baseline_forward.1} parent=11 // pred_region
          _
        $region36: #{mlp_reg_baseline_forward.1} parent=11 // pred_fallthru
          _
        // Predicated region
        $region37: #{mlp_reg_baseline_forward.1} parent=11 // pred_check
          %p272 = pneg %p192
        $region38: #{mlp_reg_baseline_forward.1} parent=11 // pred_check_branch
          %274 = sbr.rel (%p272) target = $region40
        $region39: #{mlp_reg_baseline_forward.1} parent=11 // pred_region
          _
        $region40: #{mlp_reg_baseline_forward.1} parent=11 // pred_fallthru
          _
        // Predicated region
        $region41: #{mlp_reg_baseline_forward.1} parent=11 // pred_check
          %p275 = pneg %p213
        $region42: #{mlp_reg_baseline_forward.1} parent=11 // pred_check_branch
          %277 = sbr.rel (%p275) target = $region44
        $region43: #{mlp_reg_baseline_forward.1} parent=11 // pred_region
          _
        $region44: #{mlp_reg_baseline_forward.1} parent=11 // pred_fallthru
          _
      $region12: #{mlp_reg_baseline_forward.1} parent=5 // pred_fallthru
        _
      %p278 = scmp.lt.s32.totalorder %s19, 2
      // Predicated region
      $region45: #{mlp_reg_baseline_forward.1} parent=5 // pred_check
        %p279 = pneg %p278
      $region46: #{mlp_reg_baseline_forward.1} parent=5 // pred_check_branch
        %281 = sbr.rel (%p279) target = $region48
      $region47: #{mlp_reg_baseline_forward.1} parent=5 // pred_region
        // Predicated region
        $region49: #{mlp_reg_baseline_forward.1} parent=47 // pred_check
          %p282 = pneg %p39
        $region50: #{mlp_reg_baseline_forward.1} parent=47 // pred_check_branch
          %284 = sbr.rel (%p282) target = $region52
        $region51: #{mlp_reg_baseline_forward.1} parent=47 // pred_region
          %s285 = smul.u32 16, %s19
          %s286 = ssub.s32 25, %s285
          %p287 = scmp.lt.s32.totalorder %s286, 16
          %s288 = scalar_select %p287, %s286, 16
          %s289 = smul.u32 128, %s288
          %p290 = scmp.lt.s32.totalorder %s285, 24
          %s291 = scalar_select %p290, %s285, 24
          %s292 = smul.addr %s291, 8
          %s293 = scalar_lea.vmem %s0, %s292
          %s294 = smul.u32 16, %s19
          %s295 = ssub.s32 25, %s294
          %p296 = scmp.lt.s32.totalorder %s295, 16
          %s297 = scalar_select %p296, %s295, 16
          %s298 = smul.u32 128, %s297
        $region52: #{mlp_reg_baseline_forward.1} parent=47 // pred_fallthru
          _
      $region48: #{mlp_reg_baseline_forward.1} parent=5 // pred_fallthru
        _
      %p299 = scmp.le.s32.totalorder 1, %s19
      %p300 = scmp.lt.s32.totalorder %s19, 3
      %p301 = pnand %p299, %p300
      %p302 = pneg %p301
      // Predicated region
      $region53: #{mlp_reg_baseline_forward.1} parent=5 // pred_check
        _
      $region54: #{mlp_reg_baseline_forward.1} parent=5 // pred_check_branch
        %304 = sbr.rel (%p301) target = $region56
      $region55: #{mlp_reg_baseline_forward.1} parent=5 // pred_region
        %s305 = ssub.s32 %s19, 1
        %s306 = smul.u32 16, %s24
        %s307 = ssub.s32 25, %s306
        %p308 = scmp.lt.s32.totalorder %s307, 16
        %s309 = scalar_select %p308, %s307, 16
        %s310 = smul.u32 128, %s309
        %p311 = scmp.lt.s32.totalorder %s306, 24
        %s312 = scalar_select %p311, %s306, 24
        %s313 = smul.addr %s312, 8
        %s314 = scalar_lea.vmem %s0, %s313
        %p315 = pneg %p45
        %p316 = pneg %p42
        %p317 = pneg %p66
        %p318 = pneg %p63
        %p319 = pneg %p87
        %p320 = pneg %p84
        %p321 = pneg %p108
        %p322 = pneg %p105
        %p323 = pneg %p129
        %p324 = pneg %p126
        %p325 = pneg %p150
        %p326 = pneg %p147
        %p327 = pneg %p171
        %p328 = pneg %p168
        %p329 = pneg %p192
        %p330 = pneg %p189
        %p331 = pneg %p213
        %p332 = pneg %p210
        %p333 = pneg %p239
        %p334 = pneg %p236
        %s335 = sand.u32 %s226, 1
        %s336 = scalar_lea.sflag [#allocation4], %s335
        %s337 = sand.u32 %s226, 1
        %s338 = scalar_lea.vmem [#allocation3], %s337
        %s339 = smul.u32 16, %s24
        %s340 = ssub.s32 25, %s339
        %p341 = scmp.lt.s32.totalorder %s340, 16
        %s342 = scalar_select %p341, %s340, 16
        %s343 = smul.u32 128, %s342
        %p344 = scmp.lt.s32.totalorder %s339, 24
        %s345 = scalar_select %p344, %s339, 24
        %s346 = smul.addr %s345, 8
        %s347 = scalar_lea.vmem %s0, %s346
        %s348 = smul.u32 16, %s24
        %s349 = ssub.s32 25, %s348
        %p350 = scmp.lt.s32.totalorder %s349, 16
        %s351 = scalar_select %p350, %s349, 16
        %s352 = smul.u32 128, %s351
        %v354 = vld [vmem:[%s347] sm:$0xff]
        %v355 = vld [vmem:[%s347 + $0x8] sm:$0xff]
        %v356 = vld [vmem:[%s347 + $0x10] sm:$0xff]
        %v357 = vld [vmem:[%s347 + $0x18] sm:$0xff]
        %v358 = vld [vmem:[%s347 + $0x20] sm:$0xff]
        %v359 = vld [vmem:[%s347 + $0x28] sm:$0xff]
        %v360 = vld [vmem:[%s347 + $0x30] sm:$0xff]
        %v361 = vld [vmem:[%s347 + $0x38] sm:$0xff]
        %v362 = vld [vmem:[%s347 + $0x40] sm:$0xff]
        %v363 = vld [vmem:[%s347 + $0x48] sm:$0xff]
        %v364 = vld [vmem:[%s347 + $0x50] sm:$0xff]
        %v365 = vld [vmem:[%s347 + $0x58] sm:$0xff]
        %v366 = vld [vmem:[%s347 + $0x60] sm:$0xff]
        %v367 = vld [vmem:[%s347 + $0x68] sm:$0xff]
        %v368 = vld [vmem:[%s347 + $0x70] sm:$0xff]
        %v369 = vld [vmem:[%s347 + $0x78] sm:$0xff]
        %v370 = vpack.c.bf16 %v355, %v354
        %v371 = vpack.c.bf16 %v357, %v356
        %v372 = vpack.c.bf16 %v359, %v358
        %v373 = vpack.c.bf16 %v361, %v360
        %v374 = vpack.c.bf16 %v363, %v362
        %v375 = vpack.c.bf16 %v365, %v364
        %v376 = vpack.c.bf16 %v367, %v366
        %v377 = vpack.c.bf16 %v369, %v368
        %v378 = vld [vmem:[%s1] sm:$0xf]
        %v379 = vld [vmem:[%s1 + $0x4] sm:$0xf]
        %v380 = vld [vmem:[%s1 + $0x8] sm:$0xf]
        %v381 = vld [vmem:[%s1 + $0xc] sm:$0xf]
        %v382 = vld [vmem:[%s1 + $0x10] sm:$0xf]
        %v383 = vld [vmem:[%s1 + $0x14] sm:$0xf]
        %v384 = vld [vmem:[%s1 + $0x18] sm:$0xf]
        %v385 = vld [vmem:[%s1 + $0x1c] sm:$0xf]
        %v386 = vld [vmem:[%s1 + $0x20] sm:$0xf]
        %v387 = vld [vmem:[%s1 + $0x24] sm:$0xf]
        %v388 = vld [vmem:[%s1 + $0x28] sm:$0xf]
        %v389 = vld [vmem:[%s1 + $0x2c] sm:$0xf]
        %v390 = vld [vmem:[%s1 + $0x30] sm:$0xf]
        %v391 = vld [vmem:[%s1 + $0x34] sm:$0xf]
        %v392 = vld [vmem:[%s1 + $0x38] sm:$0xf]
        %v393 = vld [vmem:[%s1 + $0x3c] sm:$0xf]
        %v394 = vld [vmem:[%s2] sm:$0x1]
        %v396 = vlaneseq
        %v397 = vshrl.u32 %v396, 7
        %v398 = vsub.s32 0, %v397
        %v399 = vrot.slane %v394, %v398
        %v417 = vunpack.c.l.b16 %v378
        %v418 = vunpack.c.l.b16 %v379
        %v419 = vunpack.c.l.b16 %v380
        %v420 = vunpack.c.l.b16 %v381
        %v421 = vunpack.c.l.b16 %v382
        %v422 = vunpack.c.l.b16 %v383
        %v423 = vunpack.c.l.b16 %v384
        %v424 = vunpack.c.l.b16 %v385
        %v425 = vunpack.c.l.b16 %v386
        %v426 = vunpack.c.l.b16 %v387
        %v427 = vunpack.c.l.b16 %v388
        %v428 = vunpack.c.l.b16 %v389
        %v429 = vunpack.c.l.b16 %v390
        %v430 = vunpack.c.l.b16 %v391
        %v431 = vunpack.c.l.b16 %v392
        %v432 = vunpack.c.l.b16 %v393
        %v433 = vpack.c.b16 %v418, %v417
        %v434 = vpack.c.b16 %v420, %v419
        %v435 = vpack.c.b16 %v422, %v421
        %v436 = vpack.c.b16 %v424, %v423
        %v437 = vpack.c.b16 %v426, %v425
        %v438 = vpack.c.b16 %v428, %v427
        %v439 = vpack.c.b16 %v430, %v429
        %v440 = vpack.c.b16 %v432, %v431
        %449 = vmatprep.subr.bf16.mxu0 0
        %450 = vmatpush1.bf16.msra.mxu0 %v433
        %451 = vmatprep.subr.bf16.mxu0 0
        %452 = vmatpush1.bf16.msra.mxu0 %v434
        %453 = vmatprep.subr.bf16.mxu0 0
        %454 = vmatpush1.bf16.msra.mxu0 %v435
        %455 = vmatprep.subr.bf16.mxu0 0
        %456 = vmatpush1.bf16.msra.mxu0 %v436
        %457 = vmatprep.subr.bf16.mxu0 0
        %458 = vmatpush1.bf16.msra.mxu0 %v437
        %459 = vmatprep.subr.bf16.mxu0 0
        %460 = vmatpush1.bf16.msra.mxu0 %v438
        %461 = vmatprep.subr.bf16.mxu0 0
        %462 = vmatpush1.bf16.msra.mxu0 %v439
        %463 = vmatprep.subr.bf16.mxu0 0
        %464 = vmatpush1.bf16.msra.mxu0 %v440
        %465 = vmatprep.subr.bf16.mxu0 0
        %466 = vmatpush1.bf16.msra.mxu0 0
        %467 = vmatprep.subr.bf16.mxu0 0
        %468 = vmatpush1.bf16.msra.mxu0 0
        %469 = vmatprep.subr.bf16.mxu0 0
        %470 = vmatpush1.bf16.msra.mxu0 0
        %471 = vmatprep.subr.bf16.mxu0 0
        %472 = vmatpush1.bf16.msra.mxu0 0
        %473 = vmatprep.subr.bf16.mxu0 0
        %474 = vmatpush1.bf16.msra.mxu0 0
        %475 = vmatprep.subr.bf16.mxu0 0
        %476 = vmatpush1.bf16.msra.mxu0 0
        %477 = vmatprep.subr.bf16.mxu0 0
        %478 = vmatpush1.bf16.msra.mxu0 0
        %479 = vmatprep.subr.bf16.mxu0 0
        %480 = vmatpush1.bf16.msra.mxu0 0
        %481 = vmatprep.mubr.bf16.mxu0 0
        %482 = vmatmul.mubr.bf16.gmra.mrb[0].mxu0 %v370
        %v483 = vpop.f32.mrb[0].mxu0
        %v484 = vadd.f32 %v399, %v483
        %v485 = vpop.f32.mrb[0].mxu0
        %v486 = vpop.f32.mrb[0].mxu0
        %v487 = vadd.f32 %v399, %v486
        %v488 = vpop.f32.mrb[0].mxu0
        %489 = vmatprep.mubr.bf16.mxu0 0
        %490 = vmatmul.mubr.bf16.gmra.mrb[0].mxu0 %v371
        %v491 = vpop.f32.mrb[0].mxu0
        %v492 = vadd.f32 %v399, %v491
        %v493 = vpop.f32.mrb[0].mxu0
        %v494 = vpop.f32.mrb[0].mxu0
        %v495 = vadd.f32 %v399, %v494
        %v496 = vpop.f32.mrb[0].mxu0
        %497 = vmatprep.mubr.bf16.mxu0 0
        %498 = vmatmul.mubr.bf16.gmra.mrb[0].mxu0 %v372
        %v499 = vpop.f32.mrb[0].mxu0
        %v500 = vadd.f32 %v399, %v499
        %v501 = vpop.f32.mrb[0].mxu0
        %v502 = vpop.f32.mrb[0].mxu0
        %v503 = vadd.f32 %v399, %v502
        %v504 = vpop.f32.mrb[0].mxu0
        %505 = vmatprep.mubr.bf16.mxu0 0
        %506 = vmatmul.mubr.bf16.gmra.mrb[0].mxu0 %v373
        %v507 = vpop.f32.mrb[0].mxu0
        %v508 = vadd.f32 %v399, %v507
        %v509 = vpop.f32.mrb[0].mxu0
        %v510 = vpop.f32.mrb[0].mxu0
        %v511 = vadd.f32 %v399, %v510
        %v512 = vpop.f32.mrb[0].mxu0
        %513 = vmatprep.mubr.bf16.mxu0 0
        %514 = vmatmul.mubr.bf16.gmra.mrb[0].mxu0 %v374
        %v515 = vpop.f32.mrb[0].mxu0
        %v516 = vadd.f32 %v399, %v515
        %v517 = vpop.f32.mrb[0].mxu0
        %v518 = vpop.f32.mrb[0].mxu0
        %v519 = vadd.f32 %v399, %v518
        %v520 = vpop.f32.mrb[0].mxu0
        %521 = vmatprep.mubr.bf16.mxu0 0
        %522 = vmatmul.mubr.bf16.gmra.mrb[0].mxu0 %v375
        %v523 = vpop.f32.mrb[0].mxu0
        %v524 = vadd.f32 %v399, %v523
        %v525 = vpop.f32.mrb[0].mxu0
        %v526 = vpop.f32.mrb[0].mxu0
        %v527 = vadd.f32 %v399, %v526
        %v528 = vpop.f32.mrb[0].mxu0
        %529 = vmatprep.mubr.bf16.mxu0 0
        %530 = vmatmul.mubr.bf16.gmra.mrb[0].mxu0 %v376
        %v531 = vpop.f32.mrb[0].mxu0
        %v532 = vadd.f32 %v399, %v531
        %v533 = vpop.f32.mrb[0].mxu0
        %v534 = vpop.f32.mrb[0].mxu0
        %v535 = vadd.f32 %v399, %v534
        %v536 = vpop.f32.mrb[0].mxu0
        %537 = vmatprep.mubr.bf16.mxu0 0
        %538 = vmatmul.mubr.bf16.gmra.mrb[0].mxu0 %v377
        %v539 = vpop.f32.mrb[0].mxu0
        %v540 = vadd.f32 %v399, %v539
        %v541 = vpop.f32.mrb[0].mxu0
        %v542 = vpop.f32.mrb[0].mxu0
        %v543 = vadd.f32 %v399, %v542
        %v544 = vpop.f32.mrb[0].mxu0
        %545 = vdwg.mxu0
        %v546 = vmax.f32 %v484, 0.0
        %v547 = vmax.f32 %v487, 0.0
        %v548 = vmax.f32 %v492, 0.0
        %v549 = vmax.f32 %v495, 0.0
        %v550 = vmax.f32 %v500, 0.0
        %v551 = vmax.f32 %v503, 0.0
        %v552 = vmax.f32 %v508, 0.0
        %v553 = vmax.f32 %v511, 0.0
        %v554 = vmax.f32 %v516, 0.0
        %v555 = vmax.f32 %v519, 0.0
        %v556 = vmax.f32 %v524, 0.0
        %v557 = vmax.f32 %v527, 0.0
        %v558 = vmax.f32 %v532, 0.0
        %v559 = vmax.f32 %v535, 0.0
        %v560 = vmax.f32 %v540, 0.0
        %v561 = vmax.f32 %v543, 0.0
        %v562 = vpack.c.bf16 %v547, %v546
        %v563 = vpack.c.bf16 %v549, %v548
        %v564 = vpack.c.bf16 %v551, %v550
        %v565 = vpack.c.bf16 %v553, %v552
        %v566 = vpack.c.bf16 %v555, %v554
        %v567 = vpack.c.bf16 %v557, %v556
        %v568 = vpack.c.bf16 %v559, %v558
        %v569 = vpack.c.bf16 %v561, %v560
        %v570 = vld [vmem:[%s3] sm:$0xf]
        %v571 = vld [vmem:[%s3 + $0x4] sm:$0xf]
        %v572 = vld [vmem:[%s3 + $0x8] sm:$0xf]
        %v573 = vld [vmem:[%s3 + $0xc] sm:$0xf]
        %v574 = vld [vmem:[%s3 + $0x10] sm:$0xf]
        %v575 = vld [vmem:[%s3 + $0x14] sm:$0xf]
        %v576 = vld [vmem:[%s3 + $0x18] sm:$0xf]
        %v577 = vld [vmem:[%s3 + $0x1c] sm:$0xf]
        %v578 = vld [vmem:[%s3 + $0x20] sm:$0xf]
        %v579 = vld [vmem:[%s3 + $0x24] sm:$0xf]
        %v580 = vld [vmem:[%s3 + $0x28] sm:$0xf]
        %v581 = vld [vmem:[%s3 + $0x2c] sm:$0xf]
        %v582 = vld [vmem:[%s3 + $0x30] sm:$0xf]
        %v583 = vld [vmem:[%s3 + $0x34] sm:$0xf]
        %v584 = vld [vmem:[%s3 + $0x38] sm:$0xf]
        %v585 = vld [vmem:[%s3 + $0x3c] sm:$0xf]
        %v586 = vld [vmem:[%s4] sm:$0x1]
        %v588 = vlaneseq
        %v589 = vshrl.u32 %v588, 7
        %v590 = vsub.s32 0, %v589
        %v591 = vrot.slane %v586, %v590
        %v609 = vunpack.c.l.b16 %v570
        %v610 = vunpack.c.l.b16 %v571
        %v611 = vunpack.c.l.b16 %v572
        %v612 = vunpack.c.l.b16 %v573
        %v613 = vunpack.c.l.b16 %v574
        %v614 = vunpack.c.l.b16 %v575
        %v615 = vunpack.c.l.b16 %v576
        %v616 = vunpack.c.l.b16 %v577
        %v617 = vunpack.c.l.b16 %v578
        %v618 = vunpack.c.l.b16 %v579
        %v619 = vunpack.c.l.b16 %v580
        %v620 = vunpack.c.l.b16 %v581
        %v621 = vunpack.c.l.b16 %v582
        %v622 = vunpack.c.l.b16 %v583
        %v623 = vunpack.c.l.b16 %v584
        %v624 = vunpack.c.l.b16 %v585
        %v625 = vpack.c.b16 %v610, %v609
        %v626 = vpack.c.b16 %v612, %v611
        %v627 = vpack.c.b16 %v614, %v613
        %v628 = vpack.c.b16 %v616, %v615
        %v629 = vpack.c.b16 %v618, %v617
        %v630 = vpack.c.b16 %v620, %v619
        %v631 = vpack.c.b16 %v622, %v621
        %v632 = vpack.c.b16 %v624, %v623
        %641 = vmatprep.subr.bf16.mxu0 0
        %642 = vmatpush1.bf16.msra.mxu0 %v625
        %643 = vmatprep.subr.bf16.mxu0 0
        %644 = vmatpush1.bf16.msra.mxu0 %v626
        %645 = vmatprep.subr.bf16.mxu0 0
        %646 = vmatpush1.bf16.msra.mxu0 %v627
        %647 = vmatprep.subr.bf16.mxu0 0
        %648 = vmatpush1.bf16.msra.mxu0 %v628
        %649 = vmatprep.subr.bf16.mxu0 0
        %650 = vmatpush1.bf16.msra.mxu0 %v629
        %651 = vmatprep.subr.bf16.mxu0 0
        %652 = vmatpush1.bf16.msra.mxu0 %v630
        %653 = vmatprep.subr.bf16.mxu0 0
        %654 = vmatpush1.bf16.msra.mxu0 %v631
        %655 = vmatprep.subr.bf16.mxu0 0
        %656 = vmatpush1.bf16.msra.mxu0 %v632
        %657 = vmatprep.subr.bf16.mxu0 0
        %658 = vmatpush1.bf16.msra.mxu0 0
        %659 = vmatprep.subr.bf16.mxu0 0
        %660 = vmatpush1.bf16.msra.mxu0 0
        %661 = vmatprep.subr.bf16.mxu0 0
        %662 = vmatpush1.bf16.msra.mxu0 0
        %663 = vmatprep.subr.bf16.mxu0 0
        %664 = vmatpush1.bf16.msra.mxu0 0
        %665 = vmatprep.subr.bf16.mxu0 0
        %666 = vmatpush1.bf16.msra.mxu0 0
        %667 = vmatprep.subr.bf16.mxu0 0
        %668 = vmatpush1.bf16.msra.mxu0 0
        %669 = vmatprep.subr.bf16.mxu0 0
        %670 = vmatpush1.bf16.msra.mxu0 0
        %671 = vmatprep.subr.bf16.mxu0 0
        %672 = vmatpush1.bf16.msra.mxu0 0
        %673 = vmatprep.mubr.bf16.mxu0 0
        %674 = vmatmul.mubr.bf16.gmra.mrb[0].mxu0 %v562
        %v675 = vpop.f32.mrb[0].mxu0
        %v676 = vadd.f32 %v591, %v675
        %v677 = vpop.f32.mrb[0].mxu0
        %v678 = vpop.f32.mrb[0].mxu0
        %v679 = vadd.f32 %v591, %v678
        %v680 = vpop.f32.mrb[0].mxu0
        %681 = vmatprep.mubr.bf16.mxu0 0
        %682 = vmatmul.mubr.bf16.gmra.mrb[0].mxu0 %v563
        %v683 = vpop.f32.mrb[0].mxu0
        %v684 = vadd.f32 %v591, %v683
        %v685 = vpop.f32.mrb[0].mxu0
        %v686 = vpop.f32.mrb[0].mxu0
        %v687 = vadd.f32 %v591, %v686
        %v688 = vpop.f32.mrb[0].mxu0
        %689 = vmatprep.mubr.bf16.mxu0 0
        %690 = vmatmul.mubr.bf16.gmra.mrb[0].mxu0 %v564
        %v691 = vpop.f32.mrb[0].mxu0
        %v692 = vadd.f32 %v591, %v691
        %v693 = vpop.f32.mrb[0].mxu0
        %v694 = vpop.f32.mrb[0].mxu0
        %v695 = vadd.f32 %v591, %v694
        %v696 = vpop.f32.mrb[0].mxu0
        %697 = vmatprep.mubr.bf16.mxu0 0
        %698 = vmatmul.mubr.bf16.gmra.mrb[0].mxu0 %v565
        %v699 = vpop.f32.mrb[0].mxu0
        %v700 = vadd.f32 %v591, %v699
        %v701 = vpop.f32.mrb[0].mxu0
        %v702 = vpop.f32.mrb[0].mxu0
        %v703 = vadd.f32 %v591, %v702
        %v704 = vpop.f32.mrb[0].mxu0
        %705 = vmatprep.mubr.bf16.mxu0 0
        %706 = vmatmul.mubr.bf16.gmra.mrb[0].mxu0 %v566
        %v707 = vpop.f32.mrb[0].mxu0
        %v708 = vadd.f32 %v591, %v707
        %v709 = vpop.f32.mrb[0].mxu0
        %v710 = vpop.f32.mrb[0].mxu0
        %v711 = vadd.f32 %v591, %v710
        %v712 = vpop.f32.mrb[0].mxu0
        %713 = vmatprep.mubr.bf16.mxu0 0
        %714 = vmatmul.mubr.bf16.gmra.mrb[0].mxu0 %v567
        %v715 = vpop.f32.mrb[0].mxu0
        %v716 = vadd.f32 %v591, %v715
        %v717 = vpop.f32.mrb[0].mxu0
        %v718 = vpop.f32.mrb[0].mxu0
        %v719 = vadd.f32 %v591, %v718
        %v720 = vpop.f32.mrb[0].mxu0
        %721 = vmatprep.mubr.bf16.mxu0 0
        %722 = vmatmul.mubr.bf16.gmra.mrb[0].mxu0 %v568
        %v723 = vpop.f32.mrb[0].mxu0
        %v724 = vadd.f32 %v591, %v723
        %v725 = vpop.f32.mrb[0].mxu0
        %v726 = vpop.f32.mrb[0].mxu0
        %v727 = vadd.f32 %v591, %v726
        %v728 = vpop.f32.mrb[0].mxu0
        %729 = vmatprep.mubr.bf16.mxu0 0
        %730 = vmatmul.mubr.bf16.gmra.mrb[0].mxu0 %v569
        %v731 = vpop.f32.mrb[0].mxu0
        %v732 = vadd.f32 %v591, %v731
        %v733 = vpop.f32.mrb[0].mxu0
        %v734 = vpop.f32.mrb[0].mxu0
        %v735 = vadd.f32 %v591, %v734
        %v736 = vpop.f32.mrb[0].mxu0
        %737 = vdwg.mxu0
        %v738 = vmax.f32 %v676, 0.0
        %v739 = vmax.f32 %v679, 0.0
        %v740 = vmax.f32 %v684, 0.0
        %v741 = vmax.f32 %v687, 0.0
        %v742 = vmax.f32 %v692, 0.0
        %v743 = vmax.f32 %v695, 0.0
        %v744 = vmax.f32 %v700, 0.0
        %v745 = vmax.f32 %v703, 0.0
        %v746 = vmax.f32 %v708, 0.0
        %v747 = vmax.f32 %v711, 0.0
        %v748 = vmax.f32 %v716, 0.0
        %v749 = vmax.f32 %v719, 0.0
        %v750 = vmax.f32 %v724, 0.0
        %v751 = vmax.f32 %v727, 0.0
        %v752 = vmax.f32 %v732, 0.0
        %v753 = vmax.f32 %v735, 0.0
        %v754 = vpack.c.bf16 %v739, %v738
        %v755 = vpack.c.bf16 %v741, %v740
        %v756 = vpack.c.bf16 %v743, %v742
        %v757 = vpack.c.bf16 %v745, %v744
        %v758 = vpack.c.bf16 %v747, %v746
        %v759 = vpack.c.bf16 %v749, %v748
        %v760 = vpack.c.bf16 %v751, %v750
        %v761 = vpack.c.bf16 %v753, %v752
        %v762 = vld [vmem:[%s5] sm:$0xf]
        %v763 = vld [vmem:[%s5 + $0x4] sm:$0xf]
        %v764 = vld [vmem:[%s5 + $0x8] sm:$0xf]
        %v765 = vld [vmem:[%s5 + $0xc] sm:$0xf]
        %v766 = vld [vmem:[%s5 + $0x10] sm:$0xf]
        %v767 = vld [vmem:[%s5 + $0x14] sm:$0xf]
        %v768 = vld [vmem:[%s5 + $0x18] sm:$0xf]
        %v769 = vld [vmem:[%s5 + $0x1c] sm:$0xf]
        %v770 = vld [vmem:[%s5 + $0x20] sm:$0xf]
        %v771 = vld [vmem:[%s5 + $0x24] sm:$0xf]
        %v772 = vld [vmem:[%s5 + $0x28] sm:$0xf]
        %v773 = vld [vmem:[%s5 + $0x2c] sm:$0xf]
        %v774 = vld [vmem:[%s5 + $0x30] sm:$0xf]
        %v775 = vld [vmem:[%s5 + $0x34] sm:$0xf]
        %v776 = vld [vmem:[%s5 + $0x38] sm:$0xf]
        %v777 = vld [vmem:[%s5 + $0x3c] sm:$0xf]
        %v778 = vld [vmem:[%s6] sm:$0x1]
        %v780 = vlaneseq
        %v781 = vshrl.u32 %v780, 7
        %v782 = vsub.s32 0, %v781
        %v783 = vrot.slane %v778, %v782
        %v801 = vunpack.c.l.b16 %v762
        %v802 = vunpack.c.l.b16 %v763
        %v803 = vunpack.c.l.b16 %v764
        %v804 = vunpack.c.l.b16 %v765
        %v805 = vunpack.c.l.b16 %v766
        %v806 = vunpack.c.l.b16 %v767
        %v807 = vunpack.c.l.b16 %v768
        %v808 = vunpack.c.l.b16 %v769
        %v809 = vunpack.c.l.b16 %v770
        %v810 = vunpack.c.l.b16 %v771
        %v811 = vunpack.c.l.b16 %v772
        %v812 = vunpack.c.l.b16 %v773
        %v813 = vunpack.c.l.b16 %v774
        %v814 = vunpack.c.l.b16 %v775
        %v815 = vunpack.c.l.b16 %v776
        %v816 = vunpack.c.l.b16 %v777
        %v817 = vpack.c.b16 %v802, %v801
        %v818 = vpack.c.b16 %v804, %v803
        %v819 = vpack.c.b16 %v806, %v805
        %v820 = vpack.c.b16 %v808, %v807
        %v821 = vpack.c.b16 %v810, %v809
        %v822 = vpack.c.b16 %v812, %v811
        %v823 = vpack.c.b16 %v814, %v813
        %v824 = vpack.c.b16 %v816, %v815
        %833 = vmatprep.subr.bf16.mxu0 0
        %834 = vmatpush1.bf16.msra.mxu0 %v817
        %835 = vmatprep.subr.bf16.mxu0 0
        %836 = vmatpush1.bf16.msra.mxu0 %v818
        %837 = vmatprep.subr.bf16.mxu0 0
        %838 = vmatpush1.bf16.msra.mxu0 %v819
        %839 = vmatprep.subr.bf16.mxu0 0
        %840 = vmatpush1.bf16.msra.mxu0 %v820
        %841 = vmatprep.subr.bf16.mxu0 0
        %842 = vmatpush1.bf16.msra.mxu0 %v821
        %843 = vmatprep.subr.bf16.mxu0 0
        %844 = vmatpush1.bf16.msra.mxu0 %v822
        %845 = vmatprep.subr.bf16.mxu0 0
        %846 = vmatpush1.bf16.msra.mxu0 %v823
        %847 = vmatprep.subr.bf16.mxu0 0
        %848 = vmatpush1.bf16.msra.mxu0 %v824
        %849 = vmatprep.subr.bf16.mxu0 0
        %850 = vmatpush1.bf16.msra.mxu0 0
        %851 = vmatprep.subr.bf16.mxu0 0
        %852 = vmatpush1.bf16.msra.mxu0 0
        %853 = vmatprep.subr.bf16.mxu0 0
        %854 = vmatpush1.bf16.msra.mxu0 0
        %855 = vmatprep.subr.bf16.mxu0 0
        %856 = vmatpush1.bf16.msra.mxu0 0
        %857 = vmatprep.subr.bf16.mxu0 0
        %858 = vmatpush1.bf16.msra.mxu0 0
        %859 = vmatprep.subr.bf16.mxu0 0
        %860 = vmatpush1.bf16.msra.mxu0 0
        %861 = vmatprep.subr.bf16.mxu0 0
        %862 = vmatpush1.bf16.msra.mxu0 0
        %863 = vmatprep.subr.bf16.mxu0 0
        %864 = vmatpush1.bf16.msra.mxu0 0
        %865 = vmatprep.mubr.bf16.mxu0 0
        %866 = vmatmul.mubr.bf16.gmra.mrb[0].mxu0 %v754
        %v867 = vpop.f32.mrb[0].mxu0
        %v868 = vadd.f32 %v783, %v867
        %v869 = vpop.f32.mrb[0].mxu0
        %v870 = vpop.f32.mrb[0].mxu0
        %v871 = vadd.f32 %v783, %v870
        %v872 = vpop.f32.mrb[0].mxu0
        %873 = vmatprep.mubr.bf16.mxu0 0
        %874 = vmatmul.mubr.bf16.gmra.mrb[0].mxu0 %v755
        %v875 = vpop.f32.mrb[0].mxu0
        %v876 = vadd.f32 %v783, %v875
        %v877 = vpop.f32.mrb[0].mxu0
        %v878 = vpop.f32.mrb[0].mxu0
        %v879 = vadd.f32 %v783, %v878
        %v880 = vpop.f32.mrb[0].mxu0
        %881 = vmatprep.mubr.bf16.mxu0 0
        %882 = vmatmul.mubr.bf16.gmra.mrb[0].mxu0 %v756
        %v883 = vpop.f32.mrb[0].mxu0
        %v884 = vadd.f32 %v783, %v883
        %v885 = vpop.f32.mrb[0].mxu0
        %v886 = vpop.f32.mrb[0].mxu0
        %v887 = vadd.f32 %v783, %v886
        %v888 = vpop.f32.mrb[0].mxu0
        %889 = vmatprep.mubr.bf16.mxu0 0
        %890 = vmatmul.mubr.bf16.gmra.mrb[0].mxu0 %v757
        %v891 = vpop.f32.mrb[0].mxu0
        %v892 = vadd.f32 %v783, %v891
        %v893 = vpop.f32.mrb[0].mxu0
        %v894 = vpop.f32.mrb[0].mxu0
        %v895 = vadd.f32 %v783, %v894
        %v896 = vpop.f32.mrb[0].mxu0
        %897 = vmatprep.mubr.bf16.mxu0 0
        %898 = vmatmul.mubr.bf16.gmra.mrb[0].mxu0 %v758
        %v899 = vpop.f32.mrb[0].mxu0
        %v900 = vadd.f32 %v783, %v899
        %v901 = vpop.f32.mrb[0].mxu0
        %v902 = vpop.f32.mrb[0].mxu0
        %v903 = vadd.f32 %v783, %v902
        %v904 = vpop.f32.mrb[0].mxu0
        %905 = vmatprep.mubr.bf16.mxu0 0
        %906 = vmatmul.mubr.bf16.gmra.mrb[0].mxu0 %v759
        %v907 = vpop.f32.mrb[0].mxu0
        %v908 = vadd.f32 %v783, %v907
        %v909 = vpop.f32.mrb[0].mxu0
        %v910 = vpop.f32.mrb[0].mxu0
        %v911 = vadd.f32 %v783, %v910
        %v912 = vpop.f32.mrb[0].mxu0
        %913 = vmatprep.mubr.bf16.mxu0 0
        %914 = vmatmul.mubr.bf16.gmra.mrb[0].mxu0 %v760
        %v915 = vpop.f32.mrb[0].mxu0
        %v916 = vadd.f32 %v783, %v915
        %v917 = vpop.f32.mrb[0].mxu0
        %v918 = vpop.f32.mrb[0].mxu0
        %v919 = vadd.f32 %v783, %v918
        %v920 = vpop.f32.mrb[0].mxu0
        %921 = vmatprep.mubr.bf16.mxu0 0
        %922 = vmatmul.mubr.bf16.gmra.mrb[0].mxu0 %v761
        %v923 = vpop.f32.mrb[0].mxu0
        %v924 = vadd.f32 %v783, %v923
        %v925 = vpop.f32.mrb[0].mxu0
        %v926 = vpop.f32.mrb[0].mxu0
        %v927 = vadd.f32 %v783, %v926
        %v928 = vpop.f32.mrb[0].mxu0
        %929 = vdwg.mxu0
        %v930 = vmax.f32 %v868, 0.0
        %v931 = vmax.f32 %v871, 0.0
        %v932 = vmax.f32 %v876, 0.0
        %v933 = vmax.f32 %v879, 0.0
        %v934 = vmax.f32 %v884, 0.0
        %v935 = vmax.f32 %v887, 0.0
        %v936 = vmax.f32 %v892, 0.0
        %v937 = vmax.f32 %v895, 0.0
        %v938 = vmax.f32 %v900, 0.0
        %v939 = vmax.f32 %v903, 0.0
        %v940 = vmax.f32 %v908, 0.0
        %v941 = vmax.f32 %v911, 0.0
        %v942 = vmax.f32 %v916, 0.0
        %v943 = vmax.f32 %v919, 0.0
        %v944 = vmax.f32 %v924, 0.0
        %v945 = vmax.f32 %v927, 0.0
        %v946 = vld [vmem:[%s7] sm:$0x1]
        %v947 = vpack.c.bf16 %v931, %v930
        %v948 = vpack.c.bf16 %v933, %v932
        %v949 = vpack.c.bf16 %v935, %v934
        %v950 = vpack.c.bf16 %v937, %v936
        %v951 = vpack.c.bf16 %v939, %v938
        %v952 = vpack.c.bf16 %v941, %v940
        %v953 = vpack.c.bf16 %v943, %v942
        %v954 = vpack.c.bf16 %v945, %v944
        %s955 = sld [smem:[#allocation2]]
        %v956 = vstv %s955
        %957 = vmatprep.subr.bf16.mxu0 0
        %958 = vmatpush1.bf16.xpose.msra.mxu0 %v947
        %959 = vmatprep.subr.bf16.mxu0 0
        %960 = vmatpush1.bf16.xpose.msra.mxu0 %v948
        %961 = vmatprep.subr.bf16.mxu0 0
        %962 = vmatpush1.bf16.xpose.msra.mxu0 %v949
        %963 = vmatprep.subr.bf16.mxu0 0
        %964 = vmatpush1.bf16.xpose.msra.mxu0 %v950
        %965 = vmatprep.subr.bf16.mxu0 0
        %966 = vmatpush1.bf16.xpose.msra.mxu0 %v951
        %967 = vmatprep.subr.bf16.mxu0 0
        %968 = vmatpush1.bf16.xpose.msra.mxu0 %v952
        %969 = vmatprep.subr.bf16.mxu0 0
        %970 = vmatpush1.bf16.xpose.msra.mxu0 %v953
        %971 = vmatprep.subr.bf16.mxu0 0
        %972 = vmatpush1.bf16.xpose.msra.mxu0 %v954
        %973 = vmatprep.subr.bf16.mxu0 0
        %974 = vmatpush1.bf16.xpose.msra.mxu0 0
        %975 = vmatprep.subr.bf16.mxu0 0
        %976 = vmatpush1.bf16.xpose.msra.mxu0 0
        %977 = vmatprep.subr.bf16.mxu0 0
        %978 = vmatpush1.bf16.xpose.msra.mxu0 0
        %979 = vmatprep.subr.bf16.mxu0 0
        %980 = vmatpush1.bf16.xpose.msra.mxu0 0
        %981 = vmatprep.subr.bf16.mxu0 0
        %982 = vmatpush1.bf16.xpose.msra.mxu0 0
        %983 = vmatprep.subr.bf16.mxu0 0
        %984 = vmatpush1.bf16.xpose.msra.mxu0 0
        %985 = vmatprep.subr.bf16.mxu0 0
        %986 = vmatpush1.bf16.xpose.msra.mxu0 0
        %987 = vmatprep.subr.bf16.mxu0 0
        %988 = vmatpush1.bf16.xpose.msra.mxu0 0
        %989 = vmatprep.mubr.bf16.mxu0 0
        %990 = vmatmul.mubr.bf16.gmra.mrb[0].mxu0 %v946
        %v991 = vpop.f32.mrb[0].mxu0
        %v992 = vadd.f32 %v956, %v991
        %v993 = vpop.f32.mrb[0].mxu0
        %v994 = vpop.f32.mrb[0].mxu0
        %v995 = vpop.f32.mrb[0].mxu0
        %996 = vdwg.mxu0
        %v997 = vxor.u32 %v992, 2147483648
        %v998 = vmul.f32 %v997, 1.442695
        %v999 = vpow.pop %v998
        %v1000 = vadd.f32 %v999, 1.0
        %v1001 = vrcp.pop %v1000
        %v1002 = vmul.f32 1.0, %v1001
        %1003 = vst [vmem:[%s338] sm:$0x1] %v1002
        %s1004 = sand.u32 %s226, 1
        %s1005 = scalar_lea.sflag [#allocation4], %s1004
        %s1006 = sand.u32 %s226, 1
        %s1007 = scalar_lea.vmem [#allocation3], %s1006
        // Predicated region
        $region57: #{mlp_reg_baseline_forward.1} parent=55 // pred_check
          %p1008 = pneg %p236
        $region58: #{mlp_reg_baseline_forward.1} parent=55 // pred_check_branch
          %1010 = sbr.rel (%p1008) target = $region60
        $region59: #{mlp_reg_baseline_forward.1} parent=55 // pred_region
          %s1012 = ssub.s32 16, 16
          %1013 = vsyncadd %s1005, %s1012
          %s1014 = smul.addr %s24, 16
          %s1015 = scalar_lea.hbm %s9, %s1014
          %s1017 = sshll.u32 %s1007, 4
          %s1018 = int_to_ptr.vmem [resolvable:$true] %s1017
          %1020 = dma.vmem_to_hbm [thread:$0]  %s1018, 16, %s1015, %s1005
        $region60: #{mlp_reg_baseline_forward.1} parent=55 // pred_fallthru
          _
      $region56: #{mlp_reg_baseline_forward.1} parent=5 // pred_fallthru
        _
      %p1021 = scmp.le.s32.totalorder 2, %s19
      // Predicated region
      $region61: #{mlp_reg_baseline_forward.1} parent=5 // pred_check
        %p1022 = pneg %p1021
      $region62: #{mlp_reg_baseline_forward.1} parent=5 // pred_check_branch
        %1024 = sbr.rel (%p1022) target = $region64
      $region63: #{mlp_reg_baseline_forward.1} parent=5 // pred_region
        %s1025 = ssub.s32 %s19, 2
        // Predicated region
        $region65: #{mlp_reg_baseline_forward.1} parent=63 // pred_check
          %p1026 = pneg %p242
        $region66: #{mlp_reg_baseline_forward.1} parent=63 // pred_check_branch
          %1028 = sbr.rel (%p1026) target = $region68
        $region67: #{mlp_reg_baseline_forward.1} parent=63 // pred_region
          %s1029 = sand.u32 %s227, 1
          %s1030 = scalar_lea.sflag [#allocation4], %s1029
          %s1031 = sand.u32 %s227, 1
          %s1032 = scalar_lea.vmem [#allocation3], %s1031
          %1033 = dma.done %s1030, 16
        $region68: #{mlp_reg_baseline_forward.1} parent=63 // pred_fallthru
          _
      $region64: #{mlp_reg_baseline_forward.1} parent=5 // pred_fallthru
        _
    $region6: #{mlp_reg_baseline_forward.1} parent=1 // loop_footer
      %s23 = sadd.s32 1, %s19
    $region7: #{mlp_reg_baseline_forward.1} parent=1 // loop_footer_branch
      %18 = sbr.rel target = $region3
    $region8: #{mlp_reg_baseline_forward.1} parent=1 // loop_exit
      _
    %1034 = vsyncpa [#allocation4], 1
    %s1035 = scalar_lea.sflag [#allocation4], 1
    %1036 = vsyncpa %s1035, 1

</llo_original>
